<compile_context>
chip_gen: v5e
topology: v5e:2x2
jax: 0.10.0
libtpu: 0.0.40
codegen_flags: <defaults>
</compile_context>

<pallas_src>
import functools
import math

import jax
import jax.numpy as jnp
from jax.experimental import pallas as pl
from jax.experimental.pallas import tpu as pltpu


_N_INFLIGHT = 8  # DMA pipeline depth inside one token tile.


def _round_up(x, m):
    return ((x + m - 1) // m) * m


def _gather_kernel(ids_ref, table_hbm, out_ref, sem, *, scale, tile):
    # ids_ref:   (n_pad,)     int32  in SMEM (scalar prefetch)
    # table_hbm: (V, D_pad)   float  in HBM (raw ref, manual DMA)
    # out_ref:   (tile, D_pad) float in VMEM (pipelined output block)
    # sem:       DMA semaphores, shape (_N_INFLIGHT,)
    i = pl.program_id(0)
    base = i * tile

    def row_copy(t):
        tok = ids_ref[base + t]
        return pltpu.make_async_copy(
            table_hbm.at[tok],            # (D_pad,) row in HBM
            out_ref.at[t],                # (D_pad,) row of the output block
            sem.at[t % _N_INFLIGHT],
        )

    # Prologue: fill the DMA pipeline.
    for t in range(min(_N_INFLIGHT, tile)):
        row_copy(t).start()

    # Steady state: wait row t, immediately refill slot with row t + depth.
    @pl.loop(0, tile)
    def _(t):
        row_copy(t).wait()

        @pl.when(t + _N_INFLIGHT < tile)
        def _():
            row_copy(t + _N_INFLIGHT).start()

    # Single VPU pass over the gathered block: scale by sqrt(d_model).
    x = out_ref[...]
    out_ref[...] = (x.astype(jnp.float32) * scale).astype(out_ref.dtype)


def input_embeddings(ids, table, *, token_tile=512):
    """ids: (B, S) int; table: (V, D) float -> (B, S, D) float."""
    B, S = ids.shape
    V, D = table.shape
    n_tok = B * S
    scale = math.sqrt(D)
    itemsize = jnp.dtype(table.dtype).itemsize

    # ---- pad d_model to a lane-dense multiple of 128 ------------------------
    d_pad = _round_up(D, 128)
    table_p = table if d_pad == D else jnp.pad(table, ((0, 0), (0, d_pad - D)))

    # ---- token tiling (sublane-dense, padded tail, >=2 grid steps if able) --
    tile = min(token_tile, _round_up(pl.cdiv(n_tok, 2), 8))
    # Keep the double-buffered output block comfortably inside VMEM on v7x.
    max_tile_by_vmem = max(8, ((24 * 1024 * 1024) // (2 * d_pad * itemsize)) // 8 * 8)
    tile = max(8, min(tile, max_tile_by_vmem))
    n_pad = _round_up(n_tok, tile)

    # Clamp ids (out-of-range would otherwise be an OOB HBM DMA) and pad tail
    # with id 0; padded rows are sliced off below.
    ids_flat = jnp.clip(ids.reshape(n_tok).astype(jnp.int32), 0, V - 1)
    if n_pad != n_tok:
        ids_flat = jnp.pad(ids_flat, (0, n_pad - n_tok))

    grid = (n_pad // tile,)

    # ---- VMEM budget: double-buffered output block is the only big tenant ---
    est_vmem = 2 * tile * d_pad * itemsize
    vmem_limit = min(max(2 * est_vmem, 16 * 1024 * 1024), 48 * 1024 * 1024)

    kernel = functools.partial(_gather_kernel, scale=scale, tile=tile)

    out_flat = pl.pallas_call(
        kernel,
        out_shape=jax.ShapeDtypeStruct((n_pad, d_pad), table.dtype),
        grid_spec=pltpu.PrefetchScalarGridSpec(
            num_scalar_prefetch=1,            # ids -> SMEM, visible to kernel
            grid=grid,
            in_specs=[
                # Embedding table stays in HBM; rows are gathered manually.
                pl.BlockSpec(memory_space=pl.ANY),
            ],
            # Output block depends only on the token grid axis.
            out_specs=pl.BlockSpec((tile, d_pad), lambda i, ids: (i, 0)),
            scratch_shapes=[pltpu.SemaphoreType.DMA((_N_INFLIGHT,))],
        ),
        compiler_params=pltpu.CompilerParams(
            dimension_semantics=("parallel",),
            vmem_limit_bytes=vmem_limit,
        ),
    )(ids_flat, table_p)

    return out_flat[:n_tok, :D].reshape(B, S, D)


if __name__ == "__main__":
    # Small deterministic setup consistent with the module:
    #   vocab_size=256, d_model=128, batch=2, seq=8
    vocab_size, d_model = 256, 128
    B, S = 2, 8

    key = jax.random.PRNGKey(0)
    k_tab, k_ids = jax.random.split(key)
    # nn.Embedding default init ~ N(0, 1)
    table = jax.random.normal(k_tab, (vocab_size, d_model), dtype=jnp.float32)
    ids = jax.random.randint(k_ids, (B, S), 0, vocab_size, dtype=jnp.int32)

    out = input_embeddings(ids, table)
    out = jax.block_until_ready(out)

    # Reference check (pure JAX): table[ids] * sqrt(d_model)
    ref = jnp.take(table, ids, axis=0) * math.sqrt(d_model)
    assert out.shape == (B, S, d_model)
    assert jnp.allclose(out, ref, atol=1e-5, rtol=1e-5), "mismatch vs reference"

    print("KERNEL_OK")
</pallas_src>

<mosaic_0001>
module attributes {stable_mosaic.version = 11 : i64} {
  func.func @_gather_kernel(%arg0: i32, %arg1: memref<16xi32, #tpu.memory_space<smem>>, %arg2: memref<256x128xf32, #tpu.memory_space<any>>, %arg3: memref<8x128xf32, #tpu.memory_space<vmem>>, %arg4: memref<8x!tpu.dma_semaphore, #tpu.memory_space<semaphore_mem>>) attributes {dimension_semantics = [#tpu.dimension_semantics<parallel>], iteration_bounds = array<i64: 2>, scalar_prefetch = 1 : i64, scratch_operands = 1 : i64, tpu.core_type = #tpu.core_type<tc>, window_params = [{}, {transform_indices = @transform_1, window_bounds = array<i64: 8, 128>}]} {
    %c8_i32 = arith.constant 8 : i32
    %0 = arith.muli %arg0, %c8_i32 : i32
    %c0_i32 = arith.constant 0 : i32
    %1 = arith.addi %0, %c0_i32 : i32
    %2 = arith.index_cast %1 : i32 to index
    %3 = memref.load %arg1[%2] : memref<16xi32, #tpu.memory_space<smem>>
    %c0_i32_0 = arith.constant 0 : i32
    %c0_i32_1 = arith.constant 0 : i32
    %c0_i32_2 = arith.constant 0 : i32
    %4 = tpu.memref_slice %arg2[%3, %c0_i32_2] : memref<256x128xf32, #tpu.memory_space<any>> -> memref<1x128xf32, #tpu.memory_space<any>>
    %5 = tpu.memref_squeeze %4 : memref<1x128xf32, #tpu.memory_space<any>> -> memref<128xf32, #tpu.memory_space<any>>
    %c0_i32_3 = arith.constant 0 : i32
    %6 = tpu.memref_slice %arg3[%c0_i32_0, %c0_i32_3] : memref<8x128xf32, #tpu.memory_space<vmem>> -> memref<1x128xf32, #tpu.memory_space<vmem>>
    %7 = tpu.memref_squeeze %6 : memref<1x128xf32, #tpu.memory_space<vmem>> -> memref<128xf32, #tpu.memory_space<vmem>>
    %8 = tpu.memref_slice %arg4[%c0_i32_1] : memref<8x!tpu.dma_semaphore, #tpu.memory_space<semaphore_mem>> -> memref<1x!tpu.dma_semaphore, #tpu.memory_space<semaphore_mem>>
    %9 = tpu.memref_squeeze %8 : memref<1x!tpu.dma_semaphore, #tpu.memory_space<semaphore_mem>> -> memref<!tpu.dma_semaphore, #tpu.memory_space<semaphore_mem>>
    tpu.enqueue_dma source(%5 : memref<128xf32, #tpu.memory_space<any>>) target(%7 : memref<128xf32, #tpu.memory_space<vmem>>) target_semaphore(%9 : memref<!tpu.dma_semaphore, #tpu.memory_space<semaphore_mem>>)
    %c1_i32 = arith.constant 1 : i32
    %10 = arith.addi %0, %c1_i32 : i32
    %11 = arith.index_cast %10 : i32 to index
    %12 = memref.load %arg1[%11] : memref<16xi32, #tpu.memory_space<smem>>
    %c1_i32_4 = arith.constant 1 : i32
    %c1_i32_5 = arith.constant 1 : i32
    %c0_i32_6 = arith.constant 0 : i32
    %13 = tpu.memref_slice %arg2[%12, %c0_i32_6] : memref<256x128xf32, #tpu.memory_space<any>> -> memref<1x128xf32, #tpu.memory_space<any>>
    %14 = tpu.memref_squeeze %13 : memref<1x128xf32, #tpu.memory_space<any>> -> memref<128xf32, #tpu.memory_space<any>>
    %c0_i32_7 = arith.constant 0 : i32
    %15 = tpu.memref_slice %arg3[%c1_i32_4, %c0_i32_7] : memref<8x128xf32, #tpu.memory_space<vmem>> -> memref<1x128xf32, #tpu.memory_space<vmem>>
    %16 = tpu.memref_squeeze %15 : memref<1x128xf32, #tpu.memory_space<vmem>> -> memref<128xf32, #tpu.memory_space<vmem>>
    %17 = tpu.memref_slice %arg4[%c1_i32_5] : memref<8x!tpu.dma_semaphore, #tpu.memory_space<semaphore_mem>> -> memref<1x!tpu.dma_semaphore, #tpu.memory_space<semaphore_mem>>
    %18 = tpu.memref_squeeze %17 : memref<1x!tpu.dma_semaphore, #tpu.memory_space<semaphore_mem>> -> memref<!tpu.dma_semaphore, #tpu.memory_space<semaphore_mem>>
    tpu.enqueue_dma source(%14 : memref<128xf32, #tpu.memory_space<any>>) target(%16 : memref<128xf32, #tpu.memory_space<vmem>>) target_semaphore(%18 : memref<!tpu.dma_semaphore, #tpu.memory_space<semaphore_mem>>)
    %c2_i32 = arith.constant 2 : i32
    %19 = arith.addi %0, %c2_i32 : i32
    %20 = arith.index_cast %19 : i32 to index
    %21 = memref.load %arg1[%20] : memref<16xi32, #tpu.memory_space<smem>>
    %c2_i32_8 = arith.constant 2 : i32
    %c2_i32_9 = arith.constant 2 : i32
    %c0_i32_10 = arith.constant 0 : i32
    %22 = tpu.memref_slice %arg2[%21, %c0_i32_10] : memref<256x128xf32, #tpu.memory_space<any>> -> memref<1x128xf32, #tpu.memory_space<any>>
    %23 = tpu.memref_squeeze %22 : memref<1x128xf32, #tpu.memory_space<any>> -> memref<128xf32, #tpu.memory_space<any>>
    %c0_i32_11 = arith.constant 0 : i32
    %24 = tpu.memref_slice %arg3[%c2_i32_8, %c0_i32_11] : memref<8x128xf32, #tpu.memory_space<vmem>> -> memref<1x128xf32, #tpu.memory_space<vmem>>
    %25 = tpu.memref_squeeze %24 : memref<1x128xf32, #tpu.memory_space<vmem>> -> memref<128xf32, #tpu.memory_space<vmem>>
    %26 = tpu.memref_slice %arg4[%c2_i32_9] : memref<8x!tpu.dma_semaphore, #tpu.memory_space<semaphore_mem>> -> memref<1x!tpu.dma_semaphore, #tpu.memory_space<semaphore_mem>>
    %27 = tpu.memref_squeeze %26 : memref<1x!tpu.dma_semaphore, #tpu.memory_space<semaphore_mem>> -> memref<!tpu.dma_semaphore, #tpu.memory_space<semaphore_mem>>
    tpu.enqueue_dma source(%23 : memref<128xf32, #tpu.memory_space<any>>) target(%25 : memref<128xf32, #tpu.memory_space<vmem>>) target_semaphore(%27 : memref<!tpu.dma_semaphore, #tpu.memory_space<semaphore_mem>>)
    %c3_i32 = arith.constant 3 : i32
    %28 = arith.addi %0, %c3_i32 : i32
    %29 = arith.index_cast %28 : i32 to index
    %30 = memref.load %arg1[%29] : memref<16xi32, #tpu.memory_space<smem>>
    %c3_i32_12 = arith.constant 3 : i32
    %c3_i32_13 = arith.constant 3 : i32
    %c0_i32_14 = arith.constant 0 : i32
    %31 = tpu.memref_slice %arg2[%30, %c0_i32_14] : memref<256x128xf32, #tpu.memory_space<any>> -> memref<1x128xf32, #tpu.memory_space<any>>
    %32 = tpu.memref_squeeze %31 : memref<1x128xf32, #tpu.memory_space<any>> -> memref<128xf32, #tpu.memory_space<any>>
    %c0_i32_15 = arith.constant 0 : i32
    %33 = tpu.memref_slice %arg3[%c3_i32_12, %c0_i32_15] : memref<8x128xf32, #tpu.memory_space<vmem>> -> memref<1x128xf32, #tpu.memory_space<vmem>>
    %34 = tpu.memref_squeeze %33 : memref<1x128xf32, #tpu.memory_space<vmem>> -> memref<128xf32, #tpu.memory_space<vmem>>
    %35 = tpu.memref_slice %arg4[%c3_i32_13] : memref<8x!tpu.dma_semaphore, #tpu.memory_space<semaphore_mem>> -> memref<1x!tpu.dma_semaphore, #tpu.memory_space<semaphore_mem>>
    %36 = tpu.memref_squeeze %35 : memref<1x!tpu.dma_semaphore, #tpu.memory_space<semaphore_mem>> -> memref<!tpu.dma_semaphore, #tpu.memory_space<semaphore_mem>>
    tpu.enqueue_dma source(%32 : memref<128xf32, #tpu.memory_space<any>>) target(%34 : memref<128xf32, #tpu.memory_space<vmem>>) target_semaphore(%36 : memref<!tpu.dma_semaphore, #tpu.memory_space<semaphore_mem>>)
    %c4_i32 = arith.constant 4 : i32
    %37 = arith.addi %0, %c4_i32 : i32
    %38 = arith.index_cast %37 : i32 to index
    %39 = memref.load %arg1[%38] : memref<16xi32, #tpu.memory_space<smem>>
    %c4_i32_16 = arith.constant 4 : i32
    %c4_i32_17 = arith.constant 4 : i32
    %c0_i32_18 = arith.constant 0 : i32
    %40 = tpu.memref_slice %arg2[%39, %c0_i32_18] : memref<256x128xf32, #tpu.memory_space<any>> -> memref<1x128xf32, #tpu.memory_space<any>>
    %41 = tpu.memref_squeeze %40 : memref<1x128xf32, #tpu.memory_space<any>> -> memref<128xf32, #tpu.memory_space<any>>
    %c0_i32_19 = arith.constant 0 : i32
    %42 = tpu.memref_slice %arg3[%c4_i32_16, %c0_i32_19] : memref<8x128xf32, #tpu.memory_space<vmem>> -> memref<1x128xf32, #tpu.memory_space<vmem>>
    %43 = tpu.memref_squeeze %42 : memref<1x128xf32, #tpu.memory_space<vmem>> -> memref<128xf32, #tpu.memory_space<vmem>>
    %44 = tpu.memref_slice %arg4[%c4_i32_17] : memref<8x!tpu.dma_semaphore, #tpu.memory_space<semaphore_mem>> -> memref<1x!tpu.dma_semaphore, #tpu.memory_space<semaphore_mem>>
    %45 = tpu.memref_squeeze %44 : memref<1x!tpu.dma_semaphore, #tpu.memory_space<semaphore_mem>> -> memref<!tpu.dma_semaphore, #tpu.memory_space<semaphore_mem>>
    tpu.enqueue_dma source(%41 : memref<128xf32, #tpu.memory_space<any>>) target(%43 : memref<128xf32, #tpu.memory_space<vmem>>) target_semaphore(%45 : memref<!tpu.dma_semaphore, #tpu.memory_space<semaphore_mem>>)
    %c5_i32 = arith.constant 5 : i32
    %46 = arith.addi %0, %c5_i32 : i32
    %47 = arith.index_cast %46 : i32 to index
    %48 = memref.load %arg1[%47] : memref<16xi32, #tpu.memory_space<smem>>
    %c5_i32_20 = arith.constant 5 : i32
    %c5_i32_21 = arith.constant 5 : i32
    %c0_i32_22 = arith.constant 0 : i32
    %49 = tpu.memref_slice %arg2[%48, %c0_i32_22] : memref<256x128xf32, #tpu.memory_space<any>> -> memref<1x128xf32, #tpu.memory_space<any>>
    %50 = tpu.memref_squeeze %49 : memref<1x128xf32, #tpu.memory_space<any>> -> memref<128xf32, #tpu.memory_space<any>>
    %c0_i32_23 = arith.constant 0 : i32
    %51 = tpu.memref_slice %arg3[%c5_i32_20, %c0_i32_23] : memref<8x128xf32, #tpu.memory_space<vmem>> -> memref<1x128xf32, #tpu.memory_space<vmem>>
    %52 = tpu.memref_squeeze %51 : memref<1x128xf32, #tpu.memory_space<vmem>> -> memref<128xf32, #tpu.memory_space<vmem>>
    %53 = tpu.memref_slice %arg4[%c5_i32_21] : memref<8x!tpu.dma_semaphore, #tpu.memory_space<semaphore_mem>> -> memref<1x!tpu.dma_semaphore, #tpu.memory_space<semaphore_mem>>
    %54 = tpu.memref_squeeze %53 : memref<1x!tpu.dma_semaphore, #tpu.memory_space<semaphore_mem>> -> memref<!tpu.dma_semaphore, #tpu.memory_space<semaphore_mem>>
    tpu.enqueue_dma source(%50 : memref<128xf32, #tpu.memory_space<any>>) target(%52 : memref<128xf32, #tpu.memory_space<vmem>>) target_semaphore(%54 : memref<!tpu.dma_semaphore, #tpu.memory_space<semaphore_mem>>)
    %c6_i32 = arith.constant 6 : i32
    %55 = arith.addi %0, %c6_i32 : i32
    %56 = arith.index_cast %55 : i32 to index
    %57 = memref.load %arg1[%56] : memref<16xi32, #tpu.memory_space<smem>>
    %c6_i32_24 = arith.constant 6 : i32
    %c6_i32_25 = arith.constant 6 : i32
    %c0_i32_26 = arith.constant 0 : i32
    %58 = tpu.memref_slice %arg2[%57, %c0_i32_26] : memref<256x128xf32, #tpu.memory_space<any>> -> memref<1x128xf32, #tpu.memory_space<any>>
    %59 = tpu.memref_squeeze %58 : memref<1x128xf32, #tpu.memory_space<any>> -> memref<128xf32, #tpu.memory_space<any>>
    %c0_i32_27 = arith.constant 0 : i32
    %60 = tpu.memref_slice %arg3[%c6_i32_24, %c0_i32_27] : memref<8x128xf32, #tpu.memory_space<vmem>> -> memref<1x128xf32, #tpu.memory_space<vmem>>
    %61 = tpu.memref_squeeze %60 : memref<1x128xf32, #tpu.memory_space<vmem>> -> memref<128xf32, #tpu.memory_space<vmem>>
    %62 = tpu.memref_slice %arg4[%c6_i32_25] : memref<8x!tpu.dma_semaphore, #tpu.memory_space<semaphore_mem>> -> memref<1x!tpu.dma_semaphore, #tpu.memory_space<semaphore_mem>>
    %63 = tpu.memref_squeeze %62 : memref<1x!tpu.dma_semaphore, #tpu.memory_space<semaphore_mem>> -> memref<!tpu.dma_semaphore, #tpu.memory_space<semaphore_mem>>
    tpu.enqueue_dma source(%59 : memref<128xf32, #tpu.memory_space<any>>) target(%61 : memref<128xf32, #tpu.memory_space<vmem>>) target_semaphore(%63 : memref<!tpu.dma_semaphore, #tpu.memory_space<semaphore_mem>>)
    %c7_i32 = arith.constant 7 : i32
    %64 = arith.addi %0, %c7_i32 : i32
    %65 = arith.index_cast %64 : i32 to index
    %66 = memref.load %arg1[%65] : memref<16xi32, #tpu.memory_space<smem>>
    %c7_i32_28 = arith.constant 7 : i32
    %c7_i32_29 = arith.constant 7 : i32
    %c0_i32_30 = arith.constant 0 : i32
    %67 = tpu.memref_slice %arg2[%66, %c0_i32_30] : memref<256x128xf32, #tpu.memory_space<any>> -> memref<1x128xf32, #tpu.memory_space<any>>
    %68 = tpu.memref_squeeze %67 : memref<1x128xf32, #tpu.memory_space<any>> -> memref<128xf32, #tpu.memory_space<any>>
    %c0_i32_31 = arith.constant 0 : i32
    %69 = tpu.memref_slice %arg3[%c7_i32_28, %c0_i32_31] : memref<8x128xf32, #tpu.memory_space<vmem>> -> memref<1x128xf32, #tpu.memory_space<vmem>>
    %70 = tpu.memref_squeeze %69 : memref<1x128xf32, #tpu.memory_space<vmem>> -> memref<128xf32, #tpu.memory_space<vmem>>
    %71 = tpu.memref_slice %arg4[%c7_i32_29] : memref<8x!tpu.dma_semaphore, #tpu.memory_space<semaphore_mem>> -> memref<1x!tpu.dma_semaphore, #tpu.memory_space<semaphore_mem>>
    %72 = tpu.memref_squeeze %71 : memref<1x!tpu.dma_semaphore, #tpu.memory_space<semaphore_mem>> -> memref<!tpu.dma_semaphore, #tpu.memory_space<semaphore_mem>>
    tpu.enqueue_dma source(%68 : memref<128xf32, #tpu.memory_space<any>>) target(%70 : memref<128xf32, #tpu.memory_space<vmem>>) target_semaphore(%72 : memref<!tpu.dma_semaphore, #tpu.memory_space<semaphore_mem>>)
    %c0_i32_32 = arith.constant 0 : i32
    %c8_i32_33 = arith.constant 8 : i32
    %73 = arith.addi %c0_i32_32, %c8_i32_33 : i32
    %c1_i32_34 = arith.constant 1 : i32
    scf.for %arg5 = %c0_i32_32 to %73 step %c1_i32_34  : i32 {
      %c1_i32_39 = arith.constant 1 : i32
      %78 = arith.muli %arg5, %c1_i32_39 : i32
      %c0_i32_40 = arith.constant 0 : i32
      %79 = arith.addi %c0_i32_40, %78 : i32
      %80 = arith.addi %0, %79 : i32
      %81 = arith.index_cast %80 : i32 to index
      %82 = memref.load %arg1[%81] : memref<16xi32, #tpu.memory_space<smem>>
      %c8_i32_41 = arith.constant 8 : i32
      %c0_i32_42 = arith.constant 0 : i32
      %83 = arith.cmpi eq, %c8_i32_41, %c0_i32_42 : i32
      %c1_i32_43 = arith.constant 1 : i32
      %84 = arith.select %83, %c1_i32_43, %c8_i32_41 : i32
      %85 = arith.remsi %79, %84 : i32
      %c0_i32_44 = arith.constant 0 : i32
      %86 = arith.cmpi ne, %85, %c0_i32_44 : i32
      %c0_i32_45 = arith.constant 0 : i32
      %87 = arith.cmpi slt, %85, %c0_i32_45 : i32
      %c0_i32_46 = arith.constant 0 : i32
      %88 = arith.cmpi slt, %84, %c0_i32_46 : i32
      %89 = arith.xori %87, %88 : i1
      %90 = arith.andi %89, %86 : i1
      %91 = arith.addi %85, %84 : i32
      %92 = arith.select %90, %91, %85 : i32
      %c0_i32_47 = arith.constant 0 : i32
      %93 = tpu.memref_slice %arg2[%82, %c0_i32_47] : memref<256x128xf32, #tpu.memory_space<any>> -> memref<1x128xf32, #tpu.memory_space<any>>
      %94 = tpu.memref_squeeze %93 : memref<1x128xf32, #tpu.memory_space<any>> -> memref<128xf32, #tpu.memory_space<any>>
      %c0_i32_48 = arith.constant 0 : i32
      %95 = tpu.memref_slice %arg3[%79, %c0_i32_48] : memref<8x128xf32, #tpu.memory_space<vmem>> -> memref<1x128xf32, #tpu.memory_space<vmem>>
      %96 = tpu.memref_squeeze %95 : memref<1x128xf32, #tpu.memory_space<vmem>> -> memref<128xf32, #tpu.memory_space<vmem>>
      %97 = tpu.memref_slice %arg4[%92] : memref<8x!tpu.dma_semaphore, #tpu.memory_space<semaphore_mem>> -> memref<1x!tpu.dma_semaphore, #tpu.memory_space<semaphore_mem>>
      %98 = tpu.memref_squeeze %97 : memref<1x!tpu.dma_semaphore, #tpu.memory_space<semaphore_mem>> -> memref<!tpu.dma_semaphore, #tpu.memory_space<semaphore_mem>>
      tpu.wait_dma2 semaphore(%98 : memref<!tpu.dma_semaphore, #tpu.memory_space<semaphore_mem>>) src(%94 : memref<128xf32, #tpu.memory_space<any>>) dst(%96 : memref<128xf32, #tpu.memory_space<vmem>>)
      %c8_i32_49 = arith.constant 8 : i32
      %99 = arith.addi %79, %c8_i32_49 : i32
      %c8_i32_50 = arith.constant 8 : i32
      %100 = arith.cmpi slt, %99, %c8_i32_50 : i32
      %101 = arith.extui %100 : i1 to i32
      %c0_i32_51 = arith.constant 0 : i32
      %102 = arith.cmpi ne, %101, %c0_i32_51 : i32
      scf.if %102 {
        %c8_i32_52 = arith.constant 8 : i32
        %103 = arith.addi %79, %c8_i32_52 : i32
        %104 = arith.addi %0, %103 : i32
        %105 = arith.index_cast %104 : i32 to index
        %106 = memref.load %arg1[%105] : memref<16xi32, #tpu.memory_space<smem>>
        %c8_i32_53 = arith.constant 8 : i32
        %c0_i32_54 = arith.constant 0 : i32
        %107 = arith.cmpi eq, %c8_i32_53, %c0_i32_54 : i32
        %c1_i32_55 = arith.constant 1 : i32
        %108 = arith.select %107, %c1_i32_55, %c8_i32_53 : i32
        %109 = arith.remsi %103, %108 : i32
        %c0_i32_56 = arith.constant 0 : i32
        %110 = arith.cmpi ne, %109, %c0_i32_56 : i32
        %c0_i32_57 = arith.constant 0 : i32
        %111 = arith.cmpi slt, %109, %c0_i32_57 : i32
        %c0_i32_58 = arith.constant 0 : i32
        %112 = arith.cmpi slt, %108, %c0_i32_58 : i32
        %113 = arith.xori %111, %112 : i1
        %114 = arith.andi %113, %110 : i1
        %115 = arith.addi %109, %108 : i32
        %116 = arith.select %114, %115, %109 : i32
        %c0_i32_59 = arith.constant 0 : i32
        %117 = tpu.memref_slice %arg2[%106, %c0_i32_59] : memref<256x128xf32, #tpu.memory_space<any>> -> memref<1x128xf32, #tpu.memory_space<any>>
        %118 = tpu.memref_squeeze %117 : memref<1x128xf32, #tpu.memory_space<any>> -> memref<128xf32, #tpu.memory_space<any>>
        %c0_i32_60 = arith.constant 0 : i32
        %119 = tpu.memref_slice %arg3[%103, %c0_i32_60] : memref<8x128xf32, #tpu.memory_space<vmem>> -> memref<1x128xf32, #tpu.memory_space<vmem>>
        %120 = tpu.memref_squeeze %119 : memref<1x128xf32, #tpu.memory_space<vmem>> -> memref<128xf32, #tpu.memory_space<vmem>>
        %121 = tpu.memref_slice %arg4[%116] : memref<8x!tpu.dma_semaphore, #tpu.memory_space<semaphore_mem>> -> memref<1x!tpu.dma_semaphore, #tpu.memory_space<semaphore_mem>>
        %122 = tpu.memref_squeeze %121 : memref<1x!tpu.dma_semaphore, #tpu.memory_space<semaphore_mem>> -> memref<!tpu.dma_semaphore, #tpu.memory_space<semaphore_mem>>
        tpu.enqueue_dma source(%118 : memref<128xf32, #tpu.memory_space<any>>) target(%120 : memref<128xf32, #tpu.memory_space<vmem>>) target_semaphore(%122 : memref<!tpu.dma_semaphore, #tpu.memory_space<semaphore_mem>>)
      } else {
      }
    }
    %c8_i32_35 = arith.constant 8 : i32
    %c0 = arith.constant 0 : index
    %c0_36 = arith.constant 0 : index
    %74 = vector.load %arg3[%c0, %c0_36] : memref<8x128xf32, #tpu.memory_space<vmem>>, vector<8x128xf32>
    %cst = arith.constant 11.3137083 : f32
    %75 = vector.broadcast %cst : f32 to vector<8x128xf32>
    %76 = arith.mulf %74, %75 : vector<8x128xf32>
    %c0_37 = arith.constant 0 : index
    %c0_38 = arith.constant 0 : index
    %77 = vector.load %arg3[%c0_37, %c0_38] : memref<8x128xf32, #tpu.memory_space<vmem>>, vector<8x128xf32>
    tpu.vector_store %arg3[%c0_37, %c0_38], %76 {strides = array<i32>} : memref<8x128xf32, #tpu.memory_space<vmem>>, vector<8x128xf32>,
    return
  }
  func.func @transform_1(%arg0: i32, %arg1: memref<16xi32, #tpu.memory_space<smem>>) -> (i32, i32) {
    %c0_i32 = arith.constant 0 : i32
    %c0_i32_0 = arith.constant 0 : i32
    return %arg0, %c0_i32 : i32, i32
  }
}

</mosaic_0001>

<llo_original>
// kernel: tpu_custom_call.1
$region0: #{tpu_custom_call.1}
  #allocation0 [shape = 'u32[]', space=smem, size = 0x4, offset = 0x4, fixed_abs, tag = 'smem constant byte address 0x4 - core index']
  #allocation1 [shape = 'u32[72,128]{1,0:T(1,128)}', space=vmem, size = 0x9000, scoped, tag = 'internal scratch']
  #allocation2 [shape = 's32[8]{0}', space=sflag, size = 0x20, scoped, tag = 'scratch operand']
  #allocation3 [shape = 's32[1]{0}', space=sflag, size = 0x4, scoped, tag = 'scoped memory for tpu_custom_call.1']
  #allocation4 [shape = 'u8[512]{0}', space=smem, size = 0x200, scoped, tag = 'prefetched SMEM operand 0']
  #allocation7 [shape = 's32[]', space=sflag, size = 0x4, offset = 0, fixed_abs, tag = 'sflag constant byte address 0x0 - dummy sync flag']
  #allocation8 [shape = 's32[]', space=sflag, size = 0x4, offset = 0, fixed_abs, tag = 'sflag constant byte address 0x0 - dummy sync flag']
  #allocation9 [shape = 'u32[]', space=smem, size = 0x4, offset = 0x44, fixed_abs, tag = 'smem constant byte address 0x44 - assertion arg 0']
  #allocation10 [shape = 'u32[]', space=smem, size = 0x4, offset = 0x48, fixed_abs, tag = 'smem constant byte address 0x48 - assertion arg 1']
  #allocation11 [shape = 's32[]', space=sflag, size = 0x4, offset = 0, fixed_abs, tag = 'sflag constant byte address 0x0 - dummy sync flag']
  #allocation12 [shape = 's32[]', space=sflag, size = 0x4, offset = 0, fixed_abs, tag = 'sflag constant byte address 0x0 - dummy sync flag']
  #allocation13 [shape = 's32[]', space=sflag, size = 0x4, offset = 0, fixed_abs, tag = 'sflag constant byte address 0x0 - dummy sync flag']
  #allocation14 [shape = 's32[]', space=sflag, size = 0x4, offset = 0, fixed_abs, tag = 'sflag constant byte address 0x0 - dummy sync flag']
  #allocation15 [shape = 's32[]', space=sflag, size = 0x4, offset = 0, fixed_abs, tag = 'sflag constant byte address 0x0 - dummy sync flag']
  #allocation16 [shape = 's32[]', space=sflag, size = 0x4, offset = 0, fixed_abs, tag = 'sflag constant byte address 0x0 - dummy sync flag']
  #allocation17 [shape = 's32[]', space=sflag, size = 0x4, offset = 0, fixed_abs, tag = 'sflag constant byte address 0x0 - dummy sync flag']
  #allocation18 [shape = 's32[]', space=sflag, size = 0x4, offset = 0, fixed_abs, tag = 'sflag constant byte address 0x0 - dummy sync flag']
  #allocation19 [shape = 's32[]', space=sflag, size = 0x4, offset = 0, fixed_abs, tag = 'sflag constant byte address 0x0 - dummy sync flag']
  #allocation20 [shape = 's32[]', space=sflag, size = 0x4, offset = 0, fixed_abs, tag = 'sflag constant byte address 0x0 - dummy sync flag']
  #allocation21 [shape = 's32[]', space=sflag, size = 0x4, offset = 0, fixed_abs, tag = 'sflag constant byte address 0x0 - dummy sync flag']
  #allocation22 [shape = 's32[]', space=sflag, size = 0x4, offset = 0, fixed_abs, tag = 'sflag constant byte address 0x0 - dummy sync flag']
  #allocation23 [shape = 's32[]', space=sflag, size = 0x4, offset = 0, fixed_abs, tag = 'sflag constant byte address 0x0 - dummy sync flag']
  #allocation24 [shape = 's32[]', space=sflag, size = 0x4, offset = 0, fixed_abs, tag = 'sflag constant byte address 0x0 - dummy sync flag']
  #allocation25 [shape = 's32[]', space=sflag, size = 0x4, offset = 0, fixed_abs, tag = 'sflag constant byte address 0x0 - dummy sync flag']
  #allocation26 [shape = 's32[]', space=sflag, size = 0x4, offset = 0, fixed_abs, tag = 'sflag constant byte address 0x0 - dummy sync flag']
  %s0 = inlined_call_operand.hbm [shape: s32[16], index: 0, kind: input, shape index: {}]
  %s1 = inlined_call_operand.hbm [shape: f32[256,128], index: 1, kind: input, shape index: {}]
  %s2 = inlined_call_operand.hbm [shape: f32[16,128], index: 2, kind: output, shape index: {}]
  %s3 = sld [smem:[#allocation0]]
  $region72: #{tpu_custom_call.1} parent=0
    _
  %s5 = ssub.s32 1, %s3
  %s6 = scalar_select 0, %s5, %s3
  %s8 = sshll.u32 %s0, 4
  %s9 = int_to_ptr.hbm [resolvable:$true] %s8
  %11 = dma.hbm_to_smem %s9, 16, [#allocation4], [#allocation3]
  %13 = dma.done [#allocation3], 16
  %14 = sfence
  $region1: #{tpu_custom_call.1} parent=0
    #allocation5 [shape = 'u8[8192]{0}', space=vmem, size = 0x2000, scoped, tag = 'output window, operand 0']
    #allocation6 [shape = 's32[2]{0}', space=sflag, size = 0x8, scoped, tag = 'scoped memory for tpu_custom_call.1']
    %15 = vsyncpa [#allocation6], 0
    %s16 = scalar_lea.sflag [#allocation6], 1
    %17 = vsyncpa %s16, 0
    loop: start=0, step=1, limit=3
    $region2: #{tpu_custom_call.1} parent=1 // loop_pre_header
      _
    $region3: #{tpu_custom_call.1} parent=1 // loop_header
      %s19 = sphi 0, %s23
      %p20 = scmp.ge.s32.totalorder %s19, 3
      %s28 = sphi 0, %s30
      %s31 = sphi 0, %s28
      %s41 = sphi 0, %s31
    $region4: #{tpu_custom_call.1} parent=1 // loop_header_branch
      %22 = sbr.rel (%p20) target = $region8
    $region5: #{tpu_custom_call.1} parent=1 // loop_body
      %s24 = ssub.s32 %s19, 1
      %s25 = sadd.s32 %s19, 1
      %s26 = ssub.s32 %s19, %s25
      %p27 = scmp.eq.s32.totalorder %s26, 0
      %s29 = sadd.s32 %s28, 1
      %s30 = scalar_select %p27, %s28, %s29
      %p32 = pneg %p27
      %p33 = scmp.eq.s32.totalorder %s19, 1
      %p34 = por %p32, %p33
      %p35 = scmp.ne.s32.totalorder %s28, %s31
      %p36 = scmp.eq.s32.totalorder %s19, 0
      %p37 = por %p35, %p36
      %p38 = scmp.ne.s32.totalorder %s28, %s31
      %p39 = scmp.eq.s32.totalorder %s24, 1
      %p40 = por %p38, %p39
      %p42 = scmp.ne.s32.totalorder %s31, %s41
      %p43 = scmp.eq.s32.totalorder %s24, 0
      %p44 = por %p42, %p43
      %p45 = scmp.lt.s32.totalorder %s19, 2
      // Predicated region
      $region9: #{tpu_custom_call.1} parent=5 // pred_check
        %p46 = pneg %p45
      $region10: #{tpu_custom_call.1} parent=5 // pred_check_branch
        %48 = sbr.rel (%p46) target = $region12
      $region11: #{tpu_custom_call.1} parent=5 // pred_region
        %p49 = pneg %p37
        %p50 = pneg %p34
        %s51 = sand.u32 %s28, 1
        %s52 = scalar_lea.sflag [#allocation6], %s51
        %s53 = sand.u32 %s28, 1
        %s54 = smul.addr %s53, 8
        %s55 = scalar_lea.vmem [#allocation5], %s54
        %s56 = smul.u32 %s19, 8
        %s57 = sld [smem:[#allocation4 + %s56]]
        %s58 = scalar_lea.hbm %s1, %s57
        // Predicated region
        $region13: #{tpu_custom_call.1} parent=11 // pred_check
          _
        $region14: #{tpu_custom_call.1} parent=11 // pred_check_branch
          %60 = sbr.rel target = $region16
        $region15: #{tpu_custom_call.1} parent=11 // pred_region
          %61 = sst [smem:[#allocation9]] [#allocation8]
          %62 = sst [smem:[#allocation10]] [#allocation7]
        $region16: #{tpu_custom_call.1} parent=11 // pred_fallthru
          _
        %64 = shalt.err (0)
        %s66 = sshll.u32 %s58, 4
        %s67 = int_to_ptr.hbm [resolvable:$true] %s66
        %s68 = sshll.u32 %s55, 4
        %s69 = int_to_ptr.vmem [resolvable:$true] %s68
        %71 = dma.hbm_to_vmem [thread:$0]  %s67, 16, %s69, [#allocation2]
        %s72 = sadd.s32 %s56, 1
        %s73 = sld [smem:[#allocation4 + %s72]]
        %s74 = scalar_lea.hbm %s1, %s73
        %s75 = scalar_lea.vmem %s55, 1 [#allocation5]
        %s76 = scalar_lea.sflag [#allocation2], 1
        // Predicated region
        $region17: #{tpu_custom_call.1} parent=11 // pred_check
          _
        $region18: #{tpu_custom_call.1} parent=11 // pred_check_branch
          %78 = sbr.rel target = $region20
        $region19: #{tpu_custom_call.1} parent=11 // pred_region
          %79 = sst [smem:[#allocation9]] [#allocation12]
          %80 = sst [smem:[#allocation10]] [#allocation11]
        $region20: #{tpu_custom_call.1} parent=11 // pred_fallthru
          _
        %82 = shalt.err (0)
        %s84 = sshll.u32 %s74, 4
        %s85 = int_to_ptr.hbm [resolvable:$true] %s84
        %s86 = sshll.u32 %s75, 4
        %s87 = int_to_ptr.vmem [resolvable:$true] %s86
        %89 = dma.hbm_to_vmem [thread:$0]  %s85, 16, %s87, %s76
        %s90 = sadd.s32 %s56, 2
        %s91 = sld [smem:[#allocation4 + %s90]]
        %s92 = scalar_lea.hbm %s1, %s91
        %s93 = scalar_lea.vmem %s55, 2 [#allocation5]
        %s94 = scalar_lea.sflag [#allocation2], 2
        // Predicated region
        $region21: #{tpu_custom_call.1} parent=11 // pred_check
          _
        $region22: #{tpu_custom_call.1} parent=11 // pred_check_branch
          %96 = sbr.rel target = $region24
        $region23: #{tpu_custom_call.1} parent=11 // pred_region
          %97 = sst [smem:[#allocation9]] [#allocation14]
          %98 = sst [smem:[#allocation10]] [#allocation13]
        $region24: #{tpu_custom_call.1} parent=11 // pred_fallthru
          _
        %100 = shalt.err (0)
        %s102 = sshll.u32 %s92, 4
        %s103 = int_to_ptr.hbm [resolvable:$true] %s102
        %s104 = sshll.u32 %s93, 4
        %s105 = int_to_ptr.vmem [resolvable:$true] %s104
        %107 = dma.hbm_to_vmem [thread:$0]  %s103, 16, %s105, %s94
        %s108 = sadd.s32 %s56, 3
        %s109 = sld [smem:[#allocation4 + %s108]]
        %s110 = scalar_lea.hbm %s1, %s109
        %s111 = scalar_lea.vmem %s55, 3 [#allocation5]
        %s112 = scalar_lea.sflag [#allocation2], 3
        // Predicated region
        $region25: #{tpu_custom_call.1} parent=11 // pred_check
          _
        $region26: #{tpu_custom_call.1} parent=11 // pred_check_branch
          %114 = sbr.rel target = $region28
        $region27: #{tpu_custom_call.1} parent=11 // pred_region
          %115 = sst [smem:[#allocation9]] [#allocation16]
          %116 = sst [smem:[#allocation10]] [#allocation15]
        $region28: #{tpu_custom_call.1} parent=11 // pred_fallthru
          _
        %118 = shalt.err (0)
        %s120 = sshll.u32 %s110, 4
        %s121 = int_to_ptr.hbm [resolvable:$true] %s120
        %s122 = sshll.u32 %s111, 4
        %s123 = int_to_ptr.vmem [resolvable:$true] %s122
        %125 = dma.hbm_to_vmem [thread:$0]  %s121, 16, %s123, %s112
        %s126 = sadd.s32 %s56, 4
        %s127 = sld [smem:[#allocation4 + %s126]]
        %s128 = scalar_lea.hbm %s1, %s127
        %s129 = scalar_lea.vmem %s55, 4 [#allocation5]
        %s130 = scalar_lea.sflag [#allocation2], 4
        // Predicated region
        $region29: #{tpu_custom_call.1} parent=11 // pred_check
          _
        $region30: #{tpu_custom_call.1} parent=11 // pred_check_branch
          %132 = sbr.rel target = $region32
        $region31: #{tpu_custom_call.1} parent=11 // pred_region
          %133 = sst [smem:[#allocation9]] [#allocation18]
          %134 = sst [smem:[#allocation10]] [#allocation17]
        $region32: #{tpu_custom_call.1} parent=11 // pred_fallthru
          _
        %136 = shalt.err (0)
        %s138 = sshll.u32 %s128, 4
        %s139 = int_to_ptr.hbm [resolvable:$true] %s138
        %s140 = sshll.u32 %s129, 4
        %s141 = int_to_ptr.vmem [resolvable:$true] %s140
        %143 = dma.hbm_to_vmem [thread:$0]  %s139, 16, %s141, %s130
        %s144 = sadd.s32 %s56, 5
        %s145 = sld [smem:[#allocation4 + %s144]]
        %s146 = scalar_lea.hbm %s1, %s145
        %s147 = scalar_lea.vmem %s55, 5 [#allocation5]
        %s148 = scalar_lea.sflag [#allocation2], 5
        // Predicated region
        $region33: #{tpu_custom_call.1} parent=11 // pred_check
          _
        $region34: #{tpu_custom_call.1} parent=11 // pred_check_branch
          %150 = sbr.rel target = $region36
        $region35: #{tpu_custom_call.1} parent=11 // pred_region
          %151 = sst [smem:[#allocation9]] [#allocation20]
          %152 = sst [smem:[#allocation10]] [#allocation19]
        $region36: #{tpu_custom_call.1} parent=11 // pred_fallthru
          _
        %154 = shalt.err (0)
        %s156 = sshll.u32 %s146, 4
        %s157 = int_to_ptr.hbm [resolvable:$true] %s156
        %s158 = sshll.u32 %s147, 4
        %s159 = int_to_ptr.vmem [resolvable:$true] %s158
        %161 = dma.hbm_to_vmem [thread:$0]  %s157, 16, %s159, %s148
        %s162 = sadd.s32 %s56, 6
        %s163 = sld [smem:[#allocation4 + %s162]]
        %s164 = scalar_lea.hbm %s1, %s163
        %s165 = scalar_lea.vmem %s55, 6 [#allocation5]
        %s166 = scalar_lea.sflag [#allocation2], 6
        // Predicated region
        $region37: #{tpu_custom_call.1} parent=11 // pred_check
          _
        $region38: #{tpu_custom_call.1} parent=11 // pred_check_branch
          %168 = sbr.rel target = $region40
        $region39: #{tpu_custom_call.1} parent=11 // pred_region
          %169 = sst [smem:[#allocation9]] [#allocation22]
          %170 = sst [smem:[#allocation10]] [#allocation21]
        $region40: #{tpu_custom_call.1} parent=11 // pred_fallthru
          _
        %172 = shalt.err (0)
        %s174 = sshll.u32 %s164, 4
        %s175 = int_to_ptr.hbm [resolvable:$true] %s174
        %s176 = sshll.u32 %s165, 4
        %s177 = int_to_ptr.vmem [resolvable:$true] %s176
        %179 = dma.hbm_to_vmem [thread:$0]  %s175, 16, %s177, %s166
        %s180 = sadd.s32 %s56, 7
        %s181 = sld [smem:[#allocation4 + %s180]]
        %s182 = scalar_lea.hbm %s1, %s181
        %s183 = scalar_lea.vmem %s55, 7 [#allocation5]
        %s184 = scalar_lea.sflag [#allocation2], 7
        // Predicated region
        $region41: #{tpu_custom_call.1} parent=11 // pred_check
          _
        $region42: #{tpu_custom_call.1} parent=11 // pred_check_branch
          %186 = sbr.rel target = $region44
        $region43: #{tpu_custom_call.1} parent=11 // pred_region
          %187 = sst [smem:[#allocation9]] [#allocation24]
          %188 = sst [smem:[#allocation10]] [#allocation23]
        $region44: #{tpu_custom_call.1} parent=11 // pred_fallthru
          _
        %190 = shalt.err (0)
        %s192 = sshll.u32 %s182, 4
        %s193 = int_to_ptr.hbm [resolvable:$true] %s192
        %s194 = sshll.u32 %s183, 4
        %s195 = int_to_ptr.vmem [resolvable:$true] %s194
        %197 = dma.hbm_to_vmem [thread:$0]  %s193, 16, %s195, %s184
        loop: start=0, step=1, limit=8
        $region45: #{tpu_custom_call.1} parent=11 // loop_pre_header
          _
        $region46: #{tpu_custom_call.1} parent=11 // loop_header
          %s199 = sphi 0, %s203
          %p200 = scmp.ge.s32.totalorder %s199, 8
        $region47: #{tpu_custom_call.1} parent=11 // loop_header_branch
          %202 = sbr.rel (%p200) target = $region51
        $region48: #{tpu_custom_call.1} parent=11 // loop_body
          %s204 = sadd.s32 %s56, %s199
          %s205 = sld [smem:[#allocation4 + %s204]]
          %p206 = scmp.lt.s32.totalorder %s199, 0
          %s207 = ssub.s32 0, %s199
          %s208 = scalar_select %p206, %s207, %s199
          %s209 = sand.u32 %s208, 7
          %s210 = ssub.s32 0, %s209
          %s211 = scalar_select %p206, %s210, %s209
          %p212 = scmp.ne.s32.totalorder %s211, 0
          %p213 = scmp.lt.s32.totalorder %s211, 0
          %p214 = pnand %p213, %p212
          %p215 = pneg %p214
          %s216 = sadd.s32 %s211, 8
          %s217 = scalar_select %p215, %s216, %s211
          %s218 = scalar_lea.sflag [#allocation2], %s217
          %220 = dma.done %s218, 16
          %s221 = sadd.s32 %s199, 8
          %p222 = scmp.lt.s32.totalorder %s221, 8
          // Predicated region
          $region52: #{tpu_custom_call.1} parent=48 // pred_check
            %p223 = pneg %p222
          $region53: #{tpu_custom_call.1} parent=48 // pred_check_branch
            %225 = sbr.rel (%p223) target = $region55
          $region54: #{tpu_custom_call.1} parent=48 // pred_region
            %s226 = sadd.s32 %s56, %s221
            %s227 = sld [smem:[#allocation4 + %s226]]
            %p228 = scmp.lt.s32.totalorder %s221, 0
            %s229 = ssub.s32 0, %s221
            %s230 = scalar_select %p228, %s229, %s221
            %s231 = sand.u32 %s230, 7
            %s232 = ssub.s32 0, %s231
            %s233 = scalar_select %p228, %s232, %s231
            %p234 = scmp.ne.s32.totalorder %s233, 0
            %p235 = scmp.lt.s32.totalorder %s233, 0
            %p236 = pnand %p235, %p234
            %p237 = pneg %p236
            %s238 = sadd.s32 %s233, 8
            %s239 = scalar_select %p237, %s238, %s233
            %s240 = scalar_lea.hbm %s1, %s227
            %s241 = scalar_lea.vmem %s55, %s221 [#allocation5]
            %s242 = scalar_lea.sflag [#allocation2], %s239
            // Predicated region
            $region56: #{tpu_custom_call.1} parent=54 // pred_check
              _
            $region57: #{tpu_custom_call.1} parent=54 // pred_check_branch
              %244 = sbr.rel target = $region59
            $region58: #{tpu_custom_call.1} parent=54 // pred_region
              %245 = sst [smem:[#allocation9]] [#allocation26]
              %246 = sst [smem:[#allocation10]] [#allocation25]
            $region59: #{tpu_custom_call.1} parent=54 // pred_fallthru
              _
            %248 = shalt.err (0)
            %s250 = sshll.u32 %s240, 4
            %s251 = int_to_ptr.hbm [resolvable:$true] %s250
            %s252 = sshll.u32 %s241, 4
            %s253 = int_to_ptr.vmem [resolvable:$true] %s252
            %255 = dma.hbm_to_vmem [thread:$0]  %s251, 16, %s253, %s242
          $region55: #{tpu_custom_call.1} parent=48 // pred_fallthru
            _
        $region49: #{tpu_custom_call.1} parent=11 // loop_footer
          %s203 = sadd.s32 1, %s199
        $region50: #{tpu_custom_call.1} parent=11 // loop_footer_branch
          %198 = sbr.rel target = $region46
        $region51: #{tpu_custom_call.1} parent=11 // loop_exit
          _
        %v256 = vld [vmem:[%s55] sm:$0xff]
        %v257 = vmul.f32 %v256, 11.313708
        %258 = vst [vmem:[%s55] sm:$0xff] %v257
        %s259 = sand.u32 %s28, 1
        %s260 = scalar_lea.sflag [#allocation6], %s259
        %s261 = sand.u32 %s28, 1
        %s262 = smul.addr %s261, 8
        %s263 = scalar_lea.vmem [#allocation5], %s262
        // Predicated region
        $region60: #{tpu_custom_call.1} parent=11 // pred_check
          %p264 = pneg %p34
        $region61: #{tpu_custom_call.1} parent=11 // pred_check_branch
          %266 = sbr.rel (%p264) target = $region63
        $region62: #{tpu_custom_call.1} parent=11 // pred_region
          %268 = vsyncadd %s260, 0
          %s269 = smul.addr %s19, 8
          %s270 = scalar_lea.hbm %s2, %s269
          %s272 = sshll.u32 %s263, 4
          %s273 = int_to_ptr.vmem [resolvable:$true] %s272
          %s274 = sshll.u32 %s270, 4
          %s275 = int_to_ptr.hbm [resolvable:$true] %s274
          %277 = dma.vmem_to_hbm [thread:$0]  %s273, 128, %s275, %s260
        $region63: #{tpu_custom_call.1} parent=11 // pred_fallthru
          _
      $region12: #{tpu_custom_call.1} parent=5 // pred_fallthru
        _
      %p278 = scmp.le.s32.totalorder 1, %s19
      // Predicated region
      $region64: #{tpu_custom_call.1} parent=5 // pred_check
        %p279 = pneg %p278
      $region65: #{tpu_custom_call.1} parent=5 // pred_check_branch
        %281 = sbr.rel (%p279) target = $region67
      $region66: #{tpu_custom_call.1} parent=5 // pred_region
        %s282 = ssub.s32 %s19, 1
        // Predicated region
        $region68: #{tpu_custom_call.1} parent=66 // pred_check
          %p283 = pneg %p40
        $region69: #{tpu_custom_call.1} parent=66 // pred_check_branch
          %285 = sbr.rel (%p283) target = $region71
        $region70: #{tpu_custom_call.1} parent=66 // pred_region
          %s286 = sand.u32 %s31, 1
          %s287 = scalar_lea.sflag [#allocation6], %s286
          %s288 = sand.u32 %s31, 1
          %s289 = smul.addr %s288, 8
          %s290 = scalar_lea.vmem [#allocation5], %s289
          %292 = dma.done %s287, 128
        $region71: #{tpu_custom_call.1} parent=66 // pred_fallthru
          _
      $region67: #{tpu_custom_call.1} parent=5 // pred_fallthru
        _
    $region6: #{tpu_custom_call.1} parent=1 // loop_footer
      %s23 = sadd.s32 1, %s19
    $region7: #{tpu_custom_call.1} parent=1 // loop_footer_branch
      %18 = sbr.rel target = $region3
    $region8: #{tpu_custom_call.1} parent=1 // loop_exit
      _
    %293 = vsyncpa [#allocation6], 1
    %s294 = scalar_lea.sflag [#allocation6], 1
    %295 = vsyncpa %s294, 1
  %296 = vsyncmov [#allocation2]
  %s297 = vpop.sfrf %296
  %p298 = scmp.eq.s32.totalorder %s297, 0
  %p299 = pneg %p298
  %301 = shalt.err (%p299)
  %s302 = scalar_lea.sflag [#allocation2], 1
  %303 = vsyncmov %s302
  %s304 = vpop.sfrf %303
  %p305 = scmp.eq.s32.totalorder %s304, 0
  %p306 = pneg %p305
  %308 = shalt.err (%p306)
  %s309 = scalar_lea.sflag [#allocation2], 2
  %310 = vsyncmov %s309
  %s311 = vpop.sfrf %310
  %p312 = scmp.eq.s32.totalorder %s311, 0
  %p313 = pneg %p312
  %315 = shalt.err (%p313)
  %s316 = scalar_lea.sflag [#allocation2], 3
  %317 = vsyncmov %s316
  %s318 = vpop.sfrf %317
  %p319 = scmp.eq.s32.totalorder %s318, 0
  %p320 = pneg %p319
  %322 = shalt.err (%p320)
  %s323 = scalar_lea.sflag [#allocation2], 4
  %324 = vsyncmov %s323
  %s325 = vpop.sfrf %324
  %p326 = scmp.eq.s32.totalorder %s325, 0
  %p327 = pneg %p326
  %329 = shalt.err (%p327)
  %s330 = scalar_lea.sflag [#allocation2], 5
  %331 = vsyncmov %s330
  %s332 = vpop.sfrf %331
  %p333 = scmp.eq.s32.totalorder %s332, 0
  %p334 = pneg %p333
  %336 = shalt.err (%p334)
  %s337 = scalar_lea.sflag [#allocation2], 6
  %338 = vsyncmov %s337
  %s339 = vpop.sfrf %338
  %p340 = scmp.eq.s32.totalorder %s339, 0
  %p341 = pneg %p340
  %343 = shalt.err (%p341)
  %s344 = scalar_lea.sflag [#allocation2], 7
  %345 = vsyncmov %s344
  %s346 = vpop.sfrf %345
  %p347 = scmp.eq.s32.totalorder %s346, 0
  %p348 = pneg %p347
  %350 = shalt.err (%p348)

</llo_original>
